<compile_context>
chip_gen: v6e
topology: v6e:2x2x1
jax: 0.10.0
libtpu: 0.0.40
codegen_flags: <defaults>
</compile_context>

<pallas_src>
import jax
import jax.numpy as jnp
from jax.experimental import pallas as pl
from jax.experimental.pallas import tpu as pltpu

LANES = 128
SUBLANE = 8
HIDDEN = 10
MAX_TILE_ROWS = 8192   # 8192*128*4B = 4 MiB per buffer
MIN_GRID_STEPS = 4     # keep >=4 grid steps so v7x's 2 TCs both get work


def mlp_kernel(x_ref, p_ref, o_ref):
    # x_ref: (tile_rows, 128) f32 lane-dense batch tile (one sample per lane).
    # p_ref: SMEM f32[2 + 2*HIDDEN] = [C0, C1, e_0..e_9, g_0..g_9].
    x = x_ref[...]
    # j = 0 term seeds the accumulator (no zero/bias broadcast init needed).
    acc = jnp.abs(x + p_ref[2]) * p_ref[2 + HIDDEN]
    for j in range(1, HIDDEN):  # unrolled at trace time, pure VPU
        acc = acc + jnp.abs(x + p_ref[2 + j]) * p_ref[2 + HIDDEN + j]
    # Affine part (C0 + C1*x) added once in the epilogue.
    o_ref[...] = (acc + (x * p_ref[1] + p_ref[0])).astype(o_ref.dtype)


def _choose_tile_rows(rows):
    if rows <= SUBLANE:
        return rows  # single block equal to the full (small) array
    target = pl.cdiv(rows, MIN_GRID_STEPS)           # aim for >= 4 grid steps
    target = pl.cdiv(target, SUBLANE) * SUBLANE      # sublane-aligned block
    return max(SUBLANE, min(MAX_TILE_ROWS, target))


@jax.jit
def simple_nn_forward(x, w1, b1, w2, b2):
    """x: (B,1) f32; w1: (1,10); b1: (1,10); w2: (10,1); b2: (1,1).

    Weights are stored transposed vs. PyTorch (in_features, out_features),
    so the math computed is relu(x @ w1 + b1) @ w2 + b2.
    """
    B = x.shape[0]

    w1f = jnp.asarray(w1, jnp.float32).reshape(HIDDEN)
    b1f = jnp.asarray(b1, jnp.float32).reshape(HIDDEN)
    w2f = jnp.asarray(w2, jnp.float32).reshape(HIDDEN)
    b2s = jnp.asarray(b2, jnp.float32).reshape(())

    # Piecewise-linear constants:  w2*relu(w1*x+b1) = 0.5*w2*w1*x + 0.5*w2*b1
    #                                                + 0.5*w2*|w1|*|x + b1/w1|
    # Units with w1 == 0 contribute the constant w2*relu(b1) (folded into C0).
    nz = w1f != 0.0
    safe_w1 = jnp.where(nz, w1f, 1.0)
    e = jnp.where(nz, b1f / safe_w1, 0.0)
    g = jnp.where(nz, 0.5 * w2f * jnp.abs(w1f), 0.0)
    c1 = jnp.sum(jnp.where(nz, 0.5 * w2f * w1f, 0.0))
    c0 = b2s + jnp.sum(jnp.where(nz, 0.5 * w2f * b1f,
                                 w2f * jnp.maximum(b1f, 0.0)))
    params = jnp.concatenate([jnp.stack([c0, c1]), e, g])  # f32[22] -> SMEM

    # Lane-dense layout: (B,1) -> (rows, 128); pad only the <128-elem tail.
    rows = pl.cdiv(B, LANES)
    pad = rows * LANES - B
    xflat = x.reshape(B).astype(jnp.float32)
    if pad:
        xflat = jnp.pad(xflat, (0, pad))
    x2d = xflat.reshape(rows, LANES)

    tile_rows = _choose_tile_rows(rows)
    grid = (pl.cdiv(rows, tile_rows),)  # ragged last block handled by Pallas

    out2d = pl.pallas_call(
        mlp_kernel,
        out_shape=jax.ShapeDtypeStruct((rows, LANES), jnp.float32),
        grid=grid,
        in_specs=[
            pl.BlockSpec((tile_rows, LANES), lambda i: (i, 0)),        # x tile
            pl.BlockSpec(memory_space=pltpu.MemorySpace.SMEM),         # params
        ],
        out_specs=pl.BlockSpec((tile_rows, LANES), lambda i: (i, 0)),
        compiler_params=pltpu.CompilerParams(
            dimension_semantics=("parallel",)),
        cost_estimate=pl.CostEstimate(
            flops=42 * rows * LANES,
            transcendentals=0,
            bytes_accessed=2 * rows * LANES * 4),
    )(x2d, params)

    out_flat = out2d.reshape(rows * LANES)
    if pad:
        # TODO(synk): a masked in-kernel store of the lane tail would avoid
        # this slice copy for B % 128 != 0; it is a no-op for aligned B.
        out_flat = out_flat[:B]
    return out_flat.reshape(B, 1)


def init_params(key):
    """Deterministic init mimicking PyTorch nn.Linear defaults."""
    k1, k2, k3, k4 = jax.random.split(key, 4)
    # fc1: Linear(1, 10): fan_in = 1 -> bound = 1.0
    w1 = jax.random.uniform(k1, (1, HIDDEN), jnp.float32, -1.0, 1.0)   # (in, out)
    b1 = jax.random.uniform(k2, (1, HIDDEN), jnp.float32, -1.0, 1.0)
    # fc2: Linear(10, 1): fan_in = 10 -> bound = 1/sqrt(10)
    bound = 1.0 / float(jnp.sqrt(10.0))
    w2 = jax.random.uniform(k3, (HIDDEN, 1), jnp.float32, -bound, bound)  # (in, out)
    b2 = jax.random.uniform(k4, (1, 1), jnp.float32, -bound, bound)
    return w1, b1, w2, b2


def _reference(x, w1, b1, w2, b2):
    return jnp.maximum(x @ w1 + b1, 0.0) @ w2 + b2


if __name__ == "__main__":
    key = jax.random.PRNGKey(0)
    pkey, xkey1, xkey2 = jax.random.split(key, 3)
    w1, b1, w2, b2 = init_params(pkey)

    # Small case (B < 128 -> single partial lane row).
    B1 = 8
    x1 = jax.random.normal(xkey1, (B1, 1), jnp.float32)
    out1 = jax.block_until_ready(simple_nn_forward(x1, w1, b1, w2, b2))
    ref1 = _reference(x1, w1, b1, w2, b2)
    assert out1.shape == (B1, 1)
    assert jnp.allclose(out1, ref1, atol=1e-5, rtol=1e-5)

    # Non-multiple-of-128 case exercising the lane-tail padding path.
    B2 = 200
    x2 = jax.random.normal(xkey2, (B2, 1), jnp.float32)
    out2 = jax.block_until_ready(simple_nn_forward(x2, w1, b1, w2, b2))
    ref2 = _reference(x2, w1, b1, w2, b2)
    assert out2.shape == (B2, 1)
    assert jnp.allclose(out2, ref2, atol=1e-5, rtol=1e-5)

    print("KERNEL_OK")
</pallas_src>

<mosaic_0001>
module attributes {stable_mosaic.version = 11 : i64} {
  func.func @mlp_kernel(%arg0: i32, %arg1: memref<1x128xf32, #tpu.memory_space<vmem>>, %arg2: memref<22xf32, #tpu.memory_space<smem>>, %arg3: memref<1x128xf32, #tpu.memory_space<vmem>>) attributes {dimension_semantics = [#tpu.dimension_semantics<parallel>], iteration_bounds = array<i64: 1>, scalar_prefetch = 0 : i64, scratch_operands = 0 : i64, tpu.core_type = #tpu.core_type<tc>, window_params = [{transform_indices = @transform_0, window_bounds = array<i64: 1, 128>}, {transform_indices = @transform_1, window_bounds = array<i64: 22>}, {transform_indices = @transform_2, window_bounds = array<i64: 1, 128>}]} {
    %c0 = arith.constant 0 : index
    %c0_0 = arith.constant 0 : index
    %0 = vector.load %arg1[%c0, %c0_0] : memref<1x128xf32, #tpu.memory_space<vmem>>, vector<1x128xf32>
    %c2 = arith.constant 2 : index
    %1 = memref.load %arg2[%c2] : memref<22xf32, #tpu.memory_space<smem>>
    %2 = vector.broadcast %1 : f32 to vector<1x128xf32>
    %3 = arith.addf %0, %2 : vector<1x128xf32>
    %4 = math.absf %3 : vector<1x128xf32>
    %c12 = arith.constant 12 : index
    %5 = memref.load %arg2[%c12] : memref<22xf32, #tpu.memory_space<smem>>
    %6 = vector.broadcast %5 : f32 to vector<1x128xf32>
    %7 = arith.mulf %4, %6 : vector<1x128xf32>
    %c3 = arith.constant 3 : index
    %8 = memref.load %arg2[%c3] : memref<22xf32, #tpu.memory_space<smem>>
    %9 = vector.broadcast %8 : f32 to vector<1x128xf32>
    %10 = arith.addf %0, %9 : vector<1x128xf32>
    %11 = math.absf %10 : vector<1x128xf32>
    %c13 = arith.constant 13 : index
    %12 = memref.load %arg2[%c13] : memref<22xf32, #tpu.memory_space<smem>>
    %13 = vector.broadcast %12 : f32 to vector<1x128xf32>
    %14 = arith.mulf %11, %13 : vector<1x128xf32>
    %15 = arith.addf %7, %14 : vector<1x128xf32>
    %c4 = arith.constant 4 : index
    %16 = memref.load %arg2[%c4] : memref<22xf32, #tpu.memory_space<smem>>
    %17 = vector.broadcast %16 : f32 to vector<1x128xf32>
    %18 = arith.addf %0, %17 : vector<1x128xf32>
    %19 = math.absf %18 : vector<1x128xf32>
    %c14 = arith.constant 14 : index
    %20 = memref.load %arg2[%c14] : memref<22xf32, #tpu.memory_space<smem>>
    %21 = vector.broadcast %20 : f32 to vector<1x128xf32>
    %22 = arith.mulf %19, %21 : vector<1x128xf32>
    %23 = arith.addf %15, %22 : vector<1x128xf32>
    %c5 = arith.constant 5 : index
    %24 = memref.load %arg2[%c5] : memref<22xf32, #tpu.memory_space<smem>>
    %25 = vector.broadcast %24 : f32 to vector<1x128xf32>
    %26 = arith.addf %0, %25 : vector<1x128xf32>
    %27 = math.absf %26 : vector<1x128xf32>
    %c15 = arith.constant 15 : index
    %28 = memref.load %arg2[%c15] : memref<22xf32, #tpu.memory_space<smem>>
    %29 = vector.broadcast %28 : f32 to vector<1x128xf32>
    %30 = arith.mulf %27, %29 : vector<1x128xf32>
    %31 = arith.addf %23, %30 : vector<1x128xf32>
    %c6 = arith.constant 6 : index
    %32 = memref.load %arg2[%c6] : memref<22xf32, #tpu.memory_space<smem>>
    %33 = vector.broadcast %32 : f32 to vector<1x128xf32>
    %34 = arith.addf %0, %33 : vector<1x128xf32>
    %35 = math.absf %34 : vector<1x128xf32>
    %c16 = arith.constant 16 : index
    %36 = memref.load %arg2[%c16] : memref<22xf32, #tpu.memory_space<smem>>
    %37 = vector.broadcast %36 : f32 to vector<1x128xf32>
    %38 = arith.mulf %35, %37 : vector<1x128xf32>
    %39 = arith.addf %31, %38 : vector<1x128xf32>
    %c7 = arith.constant 7 : index
    %40 = memref.load %arg2[%c7] : memref<22xf32, #tpu.memory_space<smem>>
    %41 = vector.broadcast %40 : f32 to vector<1x128xf32>
    %42 = arith.addf %0, %41 : vector<1x128xf32>
    %43 = math.absf %42 : vector<1x128xf32>
    %c17 = arith.constant 17 : index
    %44 = memref.load %arg2[%c17] : memref<22xf32, #tpu.memory_space<smem>>
    %45 = vector.broadcast %44 : f32 to vector<1x128xf32>
    %46 = arith.mulf %43, %45 : vector<1x128xf32>
    %47 = arith.addf %39, %46 : vector<1x128xf32>
    %c8 = arith.constant 8 : index
    %48 = memref.load %arg2[%c8] : memref<22xf32, #tpu.memory_space<smem>>
    %49 = vector.broadcast %48 : f32 to vector<1x128xf32>
    %50 = arith.addf %0, %49 : vector<1x128xf32>
    %51 = math.absf %50 : vector<1x128xf32>
    %c18 = arith.constant 18 : index
    %52 = memref.load %arg2[%c18] : memref<22xf32, #tpu.memory_space<smem>>
    %53 = vector.broadcast %52 : f32 to vector<1x128xf32>
    %54 = arith.mulf %51, %53 : vector<1x128xf32>
    %55 = arith.addf %47, %54 : vector<1x128xf32>
    %c9 = arith.constant 9 : index
    %56 = memref.load %arg2[%c9] : memref<22xf32, #tpu.memory_space<smem>>
    %57 = vector.broadcast %56 : f32 to vector<1x128xf32>
    %58 = arith.addf %0, %57 : vector<1x128xf32>
    %59 = math.absf %58 : vector<1x128xf32>
    %c19 = arith.constant 19 : index
    %60 = memref.load %arg2[%c19] : memref<22xf32, #tpu.memory_space<smem>>
    %61 = vector.broadcast %60 : f32 to vector<1x128xf32>
    %62 = arith.mulf %59, %61 : vector<1x128xf32>
    %63 = arith.addf %55, %62 : vector<1x128xf32>
    %c10 = arith.constant 10 : index
    %64 = memref.load %arg2[%c10] : memref<22xf32, #tpu.memory_space<smem>>
    %65 = vector.broadcast %64 : f32 to vector<1x128xf32>
    %66 = arith.addf %0, %65 : vector<1x128xf32>
    %67 = math.absf %66 : vector<1x128xf32>
    %c20 = arith.constant 20 : index
    %68 = memref.load %arg2[%c20] : memref<22xf32, #tpu.memory_space<smem>>
    %69 = vector.broadcast %68 : f32 to vector<1x128xf32>
    %70 = arith.mulf %67, %69 : vector<1x128xf32>
    %71 = arith.addf %63, %70 : vector<1x128xf32>
    %c11 = arith.constant 11 : index
    %72 = memref.load %arg2[%c11] : memref<22xf32, #tpu.memory_space<smem>>
    %73 = vector.broadcast %72 : f32 to vector<1x128xf32>
    %74 = arith.addf %0, %73 : vector<1x128xf32>
    %75 = math.absf %74 : vector<1x128xf32>
    %c21 = arith.constant 21 : index
    %76 = memref.load %arg2[%c21] : memref<22xf32, #tpu.memory_space<smem>>
    %77 = vector.broadcast %76 : f32 to vector<1x128xf32>
    %78 = arith.mulf %75, %77 : vector<1x128xf32>
    %79 = arith.addf %71, %78 : vector<1x128xf32>
    %c1 = arith.constant 1 : index
    %80 = memref.load %arg2[%c1] : memref<22xf32, #tpu.memory_space<smem>>
    %81 = vector.broadcast %80 : f32 to vector<1x128xf32>
    %82 = arith.mulf %0, %81 : vector<1x128xf32>
    %c0_1 = arith.constant 0 : index
    %83 = memref.load %arg2[%c0_1] : memref<22xf32, #tpu.memory_space<smem>>
    %84 = vector.broadcast %83 : f32 to vector<1x128xf32>
    %85 = arith.addf %82, %84 : vector<1x128xf32>
    %86 = arith.addf %79, %85 : vector<1x128xf32>
    %c0_2 = arith.constant 0 : index
    %c0_3 = arith.constant 0 : index
    %87 = vector.load %arg3[%c0_2, %c0_3] : memref<1x128xf32, #tpu.memory_space<vmem>>, vector<1x128xf32>
    tpu.vector_store %arg3[%c0_2, %c0_3], %86 {strides = array<i32>} : memref<1x128xf32, #tpu.memory_space<vmem>>, vector<1x128xf32>,
    return
  }
  func.func @transform_0(%arg0: i32) -> (i32, i32) {
    %c0_i32 = arith.constant 0 : i32
    %c0_i32_0 = arith.constant 0 : i32
    return %arg0, %c0_i32 : i32, i32
  }
  func.func @transform_1(%arg0: i32) -> i32 {
    %c0_i32 = arith.constant 0 : i32
    %c0_i32_0 = arith.constant 0 : i32
    return %c0_i32 : i32
  }
  func.func @transform_2(%arg0: i32) -> (i32, i32) {
    %c0_i32 = arith.constant 0 : i32
    %c0_i32_0 = arith.constant 0 : i32
    return %arg0, %c0_i32 : i32, i32
  }
}

</mosaic_0001>

<llo_original>
// kernel: simple_nn_forward.1
$region0: #{simple_nn_forward.1}
  #allocation0 [shape = 'u32[]', space=smem, size = 0x4, offset = 0x4, fixed_abs, tag = 'smem constant byte address 0x4 - core index']
  #allocation1 [shape = 'u32[144,128]{1,0:T(1,128)}', space=vmem, size = 0x12000, scoped, tag = 'internal scratch']
  %s0 = inlined_call_operand.vmem [shape: f32[1,128], index: 0, kind: input, shape index: {}]
  %s1 = inlined_call_operand.vmem [shape: f32[22], index: 1, kind: input, shape index: {}]
  %s2 = inlined_call_operand.vmem [shape: f32[1,128], index: 2, kind: output, shape index: {}]
  %s3 = sld [smem:[#allocation0]]
  $region22: #{simple_nn_forward.1} parent=0
    _
  %s5 = ssub.s32 1, %s3
  %s6 = scalar_select 0, %s5, %s3
  $region1: #{simple_nn_forward.1} parent=0
    #allocation2 [shape = 'u8[512]{0}', space=smem, size = 0x200, scoped, tag = 'input window, operand 1, single buffered']
    #allocation3 [shape = 's32[1]{0}', space=sflag, size = 0x4, scoped, tag = 'scoped memory for simple_nn_forward.1']
    %7 = vsyncpa [#allocation3], 0
    // Predicated region
    $region2: #{simple_nn_forward.1} parent=1 // pred_check
      _
    $region3: #{simple_nn_forward.1} parent=1 // pred_check_branch
      %9 = sbr.rel (0) target = $region5
    $region4: #{simple_nn_forward.1} parent=1 // pred_region
      _
    $region5: #{simple_nn_forward.1} parent=1 // pred_fallthru
      _
    // Predicated region
    $region6: #{simple_nn_forward.1} parent=1 // pred_check
      _
    $region7: #{simple_nn_forward.1} parent=1 // pred_check_branch
      %11 = sbr.rel (0) target = $region9
    $region8: #{simple_nn_forward.1} parent=1 // pred_region
      %s13 = ssub.s32 16, 16
      %14 = vsyncadd [#allocation3], %s13
      %s16 = sshll.u32 %s1, 4
      %s17 = int_to_ptr.vmem [resolvable:$true] %s16
      %19 = dma.vmem_to_smem %s17, 16, [#allocation2], [#allocation3]
    $region9: #{simple_nn_forward.1} parent=1 // pred_fallthru
      _
    // Predicated region
    $region10: #{simple_nn_forward.1} parent=1 // pred_check
      _
    $region11: #{simple_nn_forward.1} parent=1 // pred_check_branch
      %21 = sbr.rel (0) target = $region13
    $region12: #{simple_nn_forward.1} parent=1 // pred_region
      %22 = dma.done [#allocation3], 16
    $region13: #{simple_nn_forward.1} parent=1 // pred_fallthru
      _
    %23 = sfence
    %v24 = vld [vmem:[%s0] sm:$0x1]
    %s25 = sld [smem:[#allocation2 + $0x2]]
    %v26 = vstv %s25
    %v27 = vadd.f32 %v24, %v26
    %v28 = vand.u32 2147483647, %v27
    %s29 = sld [smem:[#allocation2 + $0xc]]
    %v30 = vstv %s29
    %v31 = vmul.f32 %v28, %v30
    %s32 = sld [smem:[#allocation2 + $0x3]]
    %v33 = vstv %s32
    %v34 = vadd.f32 %v24, %v33
    %v35 = vand.u32 2147483647, %v34
    %s36 = sld [smem:[#allocation2 + $0xd]]
    %v37 = vstv %s36
    %v38 = vmul.f32 %v35, %v37
    %v39 = vadd.f32 %v31, %v38
    %s40 = sld [smem:[#allocation2 + $0x4]]
    %v41 = vstv %s40
    %v42 = vadd.f32 %v24, %v41
    %v43 = vand.u32 2147483647, %v42
    %s44 = sld [smem:[#allocation2 + $0xe]]
    %v45 = vstv %s44
    %v46 = vmul.f32 %v43, %v45
    %v47 = vadd.f32 %v39, %v46
    %s48 = sld [smem:[#allocation2 + $0x5]]
    %v49 = vstv %s48
    %v50 = vadd.f32 %v24, %v49
    %v51 = vand.u32 2147483647, %v50
    %s52 = sld [smem:[#allocation2 + $0xf]]
    %v53 = vstv %s52
    %v54 = vmul.f32 %v51, %v53
    %v55 = vadd.f32 %v47, %v54
    %s56 = sld [smem:[#allocation2 + $0x6]]
    %v57 = vstv %s56
    %v58 = vadd.f32 %v24, %v57
    %v59 = vand.u32 2147483647, %v58
    %s60 = sld [smem:[#allocation2 + $0x10]]
    %v61 = vstv %s60
    %v62 = vmul.f32 %v59, %v61
    %v63 = vadd.f32 %v55, %v62
    %s64 = sld [smem:[#allocation2 + $0x7]]
    %v65 = vstv %s64
    %v66 = vadd.f32 %v24, %v65
    %v67 = vand.u32 2147483647, %v66
    %s68 = sld [smem:[#allocation2 + $0x11]]
    %v69 = vstv %s68
    %v70 = vmul.f32 %v67, %v69
    %v71 = vadd.f32 %v63, %v70
    %s72 = sld [smem:[#allocation2 + $0x8]]
    %v73 = vstv %s72
    %v74 = vadd.f32 %v24, %v73
    %v75 = vand.u32 2147483647, %v74
    %s76 = sld [smem:[#allocation2 + $0x12]]
    %v77 = vstv %s76
    %v78 = vmul.f32 %v75, %v77
    %v79 = vadd.f32 %v71, %v78
    %s80 = sld [smem:[#allocation2 + $0x9]]
    %v81 = vstv %s80
    %v82 = vadd.f32 %v24, %v81
    %v83 = vand.u32 2147483647, %v82
    %s84 = sld [smem:[#allocation2 + $0x13]]
    %v85 = vstv %s84
    %v86 = vmul.f32 %v83, %v85
    %v87 = vadd.f32 %v79, %v86
    %s88 = sld [smem:[#allocation2 + $0xa]]
    %v89 = vstv %s88
    %v90 = vadd.f32 %v24, %v89
    %v91 = vand.u32 2147483647, %v90
    %s92 = sld [smem:[#allocation2 + $0x14]]
    %v93 = vstv %s92
    %v94 = vmul.f32 %v91, %v93
    %v95 = vadd.f32 %v87, %v94
    %s96 = sld [smem:[#allocation2 + $0xb]]
    %v97 = vstv %s96
    %v98 = vadd.f32 %v24, %v97
    %v99 = vand.u32 2147483647, %v98
    %s100 = sld [smem:[#allocation2 + $0x15]]
    %v101 = vstv %s100
    %v102 = vmul.f32 %v99, %v101
    %v103 = vadd.f32 %v95, %v102
    %s104 = sld [smem:[#allocation2 + $0x1]]
    %v105 = vstv %s104
    %v106 = vmul.f32 %v24, %v105
    %s107 = sld [smem:[#allocation2]]
    %v108 = vstv %s107
    %v109 = vadd.f32 %v106, %v108
    %v110 = vadd.f32 %v103, %v109
    %111 = vst [vmem:[%s2] sm:$0x1] %v110
    // Predicated region
    $region14: #{simple_nn_forward.1} parent=1 // pred_check
      _
    $region15: #{simple_nn_forward.1} parent=1 // pred_check_branch
      %113 = sbr.rel (0) target = $region17
    $region16: #{simple_nn_forward.1} parent=1 // pred_region
      _
    $region17: #{simple_nn_forward.1} parent=1 // pred_fallthru
      _
    // Predicated region
    $region18: #{simple_nn_forward.1} parent=1 // pred_check
      _
    $region19: #{simple_nn_forward.1} parent=1 // pred_check_branch
      %115 = sbr.rel (0) target = $region21
    $region20: #{simple_nn_forward.1} parent=1 // pred_region
      _
    $region21: #{simple_nn_forward.1} parent=1 // pred_fallthru
      _
    %116 = vsyncpa [#allocation3], 1

</llo_original>
